<compile_context>
chip_gen: v7x
topology: tpu7x:2x2x1
jax: 0.10.0
libtpu: 0.0.40
codegen_flags: <defaults>
</compile_context>

<pallas_src>
import functools

import jax
import jax.numpy as jnp
from jax import lax
from jax.experimental import pallas as pl
from jax.experimental.pallas import tpu as pltpu


def _round_up(x, m):
    return (x + m - 1) // m * m


def _vmem_limit(block_bytes):
    # Double-buffered pipeline + headroom.  Only override the 32 MiB default
    # when the chosen tiles actually need more; stay within v7x's 64 MiB.
    need = int(2.5 * block_bytes) + (2 << 20)
    if need <= (32 << 20):
        return None
    return min(need, 64 << 20)


# ---------------------------------------------------------------------------
# Stage A: affine = X1 @ Wa + ba          (one big GEMM, batch folded into M)
# ---------------------------------------------------------------------------
def _affine_kernel(x1_ref, w_ref, b_ref, out_ref):
    # x1: (tm, K), w: (K, tn), b: (1, tn)  -> out: (tm, tn)
    acc = jnp.dot(x1_ref[...], w_ref[...], preferred_element_type=jnp.float32)
    out_ref[...] = (acc + b_ref[...].astype(jnp.float32)).astype(out_ref.dtype)


def _affine_matmul(x1, wa, ba):
    M, K = x1.shape
    K2, N = wa.shape
    assert K == K2 and ba.shape == (1, N)

    tm = M if M <= 512 else 512          # 512 % 8 == 0; M <= 512 -> full dim
    tn = N if N <= 512 else 512          # N is a multiple of 128 by construction
    grid = (pl.cdiv(M, tm), pl.cdiv(N, tn))

    itemsize = jnp.dtype(x1.dtype).itemsize
    cost = pl.CostEstimate(
        flops=2 * M * K * N,
        transcendentals=0,
        bytes_accessed=(M * K + K * N + N + M * N) * itemsize,
    )
    block_bytes = (tm * K + K * tn + tn + tm * tn) * itemsize

    return pl.pallas_call(
        _affine_kernel,
        out_shape=jax.ShapeDtypeStruct((M, N), x1.dtype),
        grid_spec=pltpu.PrefetchScalarGridSpec(
            num_scalar_prefetch=0,
            grid=grid,
            in_specs=[
                pl.BlockSpec((tm, K), lambda i, j: (i, 0)),
                pl.BlockSpec((K, tn), lambda i, j: (0, j)),
                pl.BlockSpec((1, tn), lambda i, j: (0, j)),
            ],
            out_specs=pl.BlockSpec((tm, tn), lambda i, j: (i, j)),
        ),
        compiler_params=pltpu.CompilerParams(
            dimension_semantics=("parallel", "parallel"),
            vmem_limit_bytes=_vmem_limit(block_bytes),
        ),
        cost_estimate=cost,
    )(x1, wa, ba)


# ---------------------------------------------------------------------------
# Stage B: scores[b, j, r] = sum_k x2p[b, j, k] * affine_r[b, r, k]
#          (per-batch bmm, lane-dense (tj, tr) output, r = i*out_dim+o)
# ---------------------------------------------------------------------------
def _scores_kernel(x2_ref, aff_ref, out_ref):
    # x2: (1, tj, d2p), aff: (1, tr, d2p) -> (tj, tr).  Contract the last dims:
    # no transposes inside the kernel, f32 accumulation on the MXU.
    s = lax.dot_general(
        x2_ref[0], aff_ref[0],
        dimension_numbers=(((1,), (1,)), ((), ())),
        preferred_element_type=jnp.float32)
    out_ref[0] = s.astype(out_ref.dtype)


def _scores_bmm(x2p, affine_r, out_dtype):
    B, L, d2p = x2p.shape
    B2, R, d2p2 = affine_r.shape
    assert B == B2 and d2p == d2p2

    tj = L if L <= 256 else 256          # 256 % 8 == 0; L <= 256 -> full dim
    tr = R if R <= 512 else 512          # 512 % 128 == 0; R <= 512 -> full dim
    # r is the innermost (fastest) grid axis so the x2p block stays resident
    # (Pallas skips the DMA when the block index does not change).
    grid = (B, pl.cdiv(L, tj), pl.cdiv(R, tr))

    itemsize = jnp.dtype(x2p.dtype).itemsize
    cost = pl.CostEstimate(
        flops=2 * B * L * R * d2p,
        transcendentals=0,
        bytes_accessed=B * (L * d2p + R * d2p) * itemsize
        + B * L * R * jnp.dtype(out_dtype).itemsize,
    )
    block_bytes = (tj * d2p + tr * d2p + tj * tr) * itemsize

    return pl.pallas_call(
        _scores_kernel,
        out_shape=jax.ShapeDtypeStruct((B, L, R), out_dtype),
        grid_spec=pltpu.PrefetchScalarGridSpec(
            num_scalar_prefetch=0,
            grid=grid,
            in_specs=[
                pl.BlockSpec((1, tj, d2p), lambda b, j, r: (b, j, 0)),
                pl.BlockSpec((1, tr, d2p), lambda b, j, r: (b, r, 0)),
            ],
            out_specs=pl.BlockSpec((1, tj, tr), lambda b, j, r: (b, j, r)),
        ),
        compiler_params=pltpu.CompilerParams(
            dimension_semantics=("parallel", "parallel", "parallel"),
            vmem_limit_bytes=_vmem_limit(block_bytes),
        ),
        cost_estimate=cost,
    )(x2p, affine_r)


# ---------------------------------------------------------------------------
# Forward wrapper
# ---------------------------------------------------------------------------
def biaffine_forward(input1, input2, weight, out_dim, bias_dim=(1, 1),
                     compute_dtype=None):
    """Pallas implementation of BiAffineLayer.forward.

    input1: (B, L, in1_dim), input2: (B, L, in2_dim)
    weight: (out_dim * (in2_dim + bias_dim[1]), in1_dim + bias_dim[0])
    returns (B, L, L, out_dim) with out[b, j, i, o] matching PyTorch.
    compute_dtype: set jnp.bfloat16 on v6e/v7x for MXU throughput (f32 accum).
    """
    B, L, d1 = input1.shape
    B2, L2, d2 = input2.shape
    assert B == B2 and L == L2
    b1, b2 = bias_dim
    d1b, d2b = d1 + b1, d2 + b2
    lin_out = out_dim * d2b
    assert weight.shape == (lin_out, d1b)

    cdtype = jnp.dtype(compute_dtype) if compute_dtype is not None else input1.dtype
    out_dtype = input1.dtype

    # Lane-align stage B's contraction dim.
    d2p = _round_up(d2b, 128)

    # --- one-time weight prep (all weight-sized ops, no input passes) -------
    w3 = weight.reshape(out_dim, d2b, d1b)                        # [o, k, m]
    w3p = jnp.pad(w3, ((0, 0), (0, d2p - d2b), (0, 0)))           # zero-pad k
    wa = w3p[:, :, :d1].reshape(out_dim * d2p, d1).T              # (d1, out*d2p)
    if b1 > 0:
        # input1's bias columns are all ones -> fold into a broadcast row.
        ba = w3p[:, :, d1:].sum(axis=-1).reshape(1, out_dim * d2p)
    else:
        ba = jnp.zeros((1, out_dim * d2p), weight.dtype)
    wa = wa.astype(cdtype)
    ba = ba.astype(cdtype)

    # --- inputs --------------------------------------------------------------
    x1 = input1.reshape(B * L, d1).astype(cdtype)                 # free reshape
    parts = [input2.astype(cdtype)]
    if b2 > 0:
        parts.append(jnp.ones((B, L, b2), cdtype))
    if d2p > d2b:
        parts.append(jnp.zeros((B, L, d2p - d2b), cdtype))
    x2p = jnp.concatenate(parts, axis=2) if len(parts) > 1 else parts[0]

    # --- stage A: affine over all batches at once ----------------------------
    affine = _affine_matmul(x1, wa, ba)                           # (B*L, out*d2p)
    # Row-major metadata reshape (free): (b*L+i, o*d2p+k) -> (b, i*out_dim+o, k)
    affine_r = affine.reshape(B, L * out_dim, d2p)

    # --- stage B: per-batch scores, lane-dense last dim -----------------------
    scores = _scores_bmm(x2p, affine_r, out_dtype)                # (B, L, L*out)

    # scores[b, j, i*out_dim + o] == out[b, j, i, o]  -> pure reshape, no transpose.
    return scores.reshape(B, L, L, out_dim)


# ---------------------------------------------------------------------------
# Pure-JAX reference (mirrors the PyTorch module)
# ---------------------------------------------------------------------------
def biaffine_reference(input1, input2, weight, out_dim, bias_dim=(1, 1)):
    B, L, _ = input1.shape
    if bias_dim[0] > 0:
        input1 = jnp.concatenate(
            [input1, jnp.ones((B, L, bias_dim[0]), input1.dtype)], axis=2)
    if bias_dim[1] > 0:
        input2 = jnp.concatenate(
            [input2, jnp.ones((B, L, bias_dim[1]), input2.dtype)], axis=2)
    d2b = input2.shape[-1]
    affine = jnp.einsum("blm,nm->bln", input1, weight)            # (B, L, out*d2b)
    affine = affine.reshape(B, L * out_dim, d2b)
    scores = jnp.einsum("bnk,bjk->bnj", affine, input2)           # (B, L*out, L)
    return scores.reshape(B, L, out_dim, L).transpose(0, 3, 1, 2)


if __name__ == "__main__":
    # Small, module-consistent shapes.
    B, L = 2, 8
    in1_dim, in2_dim, out_dim = 32, 32, 4
    bias_dim = (1, 1)
    d1b = in1_dim + bias_dim[0]
    d2b = in2_dim + bias_dim[1]
    lin_out = out_dim * d2b

    key = jax.random.PRNGKey(0)
    k1, k2, kw = jax.random.split(key, 3)
    input1 = jax.random.normal(k1, (B, L, in1_dim), dtype=jnp.float32)
    input2 = jax.random.normal(k2, (B, L, in2_dim), dtype=jnp.float32)
    # The PyTorch module zero-inits the (trainable) linear weight; use a
    # deterministic random init so the kernel computes something non-trivial.
    weight = 0.05 * jax.random.normal(kw, (lin_out, d1b), dtype=jnp.float32)

    # f32 compute here for a tight correctness check; pass
    # compute_dtype=jnp.bfloat16 on v6e/v7x (loosen tolerances accordingly).
    fwd = jax.jit(functools.partial(
        biaffine_forward, out_dim=out_dim, bias_dim=bias_dim))
    out = jax.block_until_ready(fwd(input1, input2, weight))

    ref = biaffine_reference(input1, input2, weight, out_dim, bias_dim)
    assert out.shape == (B, L, L, out_dim)
    assert jnp.allclose(out, ref, atol=1e-3, rtol=1e-3), "mismatch vs reference"

    print("KERNEL_OK")
</pallas_src>

<mosaic_0001>
module attributes {stable_mosaic.version = 11 : i64} {
  func.func @_scores_kernel(%arg0: i32, %arg1: i32, %arg2: i32, %arg3: memref<1x8x128xf32, #tpu.memory_space<vmem>>, %arg4: memref<1x32x128xf32, #tpu.memory_space<vmem>>, %arg5: memref<1x8x32xf32, #tpu.memory_space<vmem>>) attributes {dimension_semantics = [#tpu.dimension_semantics<parallel>, #tpu.dimension_semantics<parallel>, #tpu.dimension_semantics<parallel>], iteration_bounds = array<i64: 2, 1, 1>, scalar_prefetch = 0 : i64, scratch_operands = 0 : i64, tpu.core_type = #tpu.core_type<tc>, window_params = [{transform_indices = @transform_0, window_bounds = array<i64: 1, 8, 128>}, {transform_indices = @transform_1, window_bounds = array<i64: 1, 32, 128>}, {transform_indices = @transform_2, window_bounds = array<i64: 1, 8, 32>}]} {
    %c0 = arith.constant 0 : index
    %c0_0 = arith.constant 0 : index
    %c0_1 = arith.constant 0 : index
    %0 = vector.load %arg3[%c0, %c0_0, %c0_1] : memref<1x8x128xf32, #tpu.memory_space<vmem>>, vector<1x8x128xf32>
    %1 = vector.shape_cast %0 : vector<1x8x128xf32> to vector<8x128xf32>
    %c0_2 = arith.constant 0 : index
    %c0_3 = arith.constant 0 : index
    %c0_4 = arith.constant 0 : index
    %2 = vector.load %arg4[%c0_2, %c0_3, %c0_4] : memref<1x32x128xf32, #tpu.memory_space<vmem>>, vector<1x32x128xf32>
    %3 = vector.shape_cast %2 : vector<1x32x128xf32> to vector<32x128xf32>
    %cst = arith.constant dense<0.000000e+00> : vector<8x32xf32>
    %4 = tpu.matmul %1, %3, %cst {dimension_numbers = #tpu.dot_dimension_numbers<[1], [1], [0], [0], [0, 0, 1, 0], [], []>} : vector<8x128xf32>, vector<32x128xf32>, vector<8x32xf32> -> vector<8x32xf32>
    %c0_5 = arith.constant 0 : index
    %c0_6 = arith.constant 0 : index
    %c0_7 = arith.constant 0 : index
    %5 = vector.load %arg5[%c0_5, %c0_6, %c0_7] : memref<1x8x32xf32, #tpu.memory_space<vmem>>, vector<1x8x32xf32>
    %6 = vector.shape_cast %5 : vector<1x8x32xf32> to vector<8x32xf32>
    %7 = vector.shape_cast %4 : vector<8x32xf32> to vector<1x8x32xf32>
    tpu.vector_store %arg5[%c0_5, %c0_6, %c0_7], %7 {strides = array<i32>} : memref<1x8x32xf32, #tpu.memory_space<vmem>>, vector<1x8x32xf32>,
    return
  }
  func.func @transform_0(%arg0: i32, %arg1: i32, %arg2: i32) -> (i32, i32, i32) {
    %c0_i32 = arith.constant 0 : i32
    %c0_i32_0 = arith.constant 0 : i32
    return %arg0, %arg1, %c0_i32 : i32, i32, i32
  }
  func.func @transform_1(%arg0: i32, %arg1: i32, %arg2: i32) -> (i32, i32, i32) {
    %c0_i32 = arith.constant 0 : i32
    %c0_i32_0 = arith.constant 0 : i32
    return %arg0, %arg2, %c0_i32 : i32, i32, i32
  }
  func.func @transform_2(%arg0: i32, %arg1: i32, %arg2: i32) -> (i32, i32, i32) {
    %c0_i32 = arith.constant 0 : i32
    return %arg0, %arg1, %arg2 : i32, i32, i32
  }
}

module attributes {stable_mosaic.version = 11 : i64} {
  func.func @_affine_kernel(%arg0: i32, %arg1: i32, %arg2: memref<16x32xf32, #tpu.memory_space<vmem>>, %arg3: memref<32x512xf32, #tpu.memory_space<vmem>>, %arg4: memref<1x512xf32, #tpu.memory_space<vmem>>, %arg5: memref<16x512xf32, #tpu.memory_space<vmem>>) attributes {dimension_semantics = [#tpu.dimension_semantics<parallel>, #tpu.dimension_semantics<parallel>], iteration_bounds = array<i64: 1, 1>, scalar_prefetch = 0 : i64, scratch_operands = 0 : i64, tpu.core_type = #tpu.core_type<tc>, window_params = [{transform_indices = @transform_0, window_bounds = array<i64: 16, 32>}, {transform_indices = @transform_1, window_bounds = array<i64: 32, 512>}, {transform_indices = @transform_2, window_bounds = array<i64: 1, 512>}, {transform_indices = @transform_3, window_bounds = array<i64: 16, 512>}]} {
    %c0 = arith.constant 0 : index
    %c0_0 = arith.constant 0 : index
    %0 = vector.load %arg2[%c0, %c0_0] : memref<16x32xf32, #tpu.memory_space<vmem>>, vector<16x32xf32>
    %c0_1 = arith.constant 0 : index
    %c0_2 = arith.constant 0 : index
    %1 = vector.load %arg3[%c0_1, %c0_2] : memref<32x512xf32, #tpu.memory_space<vmem>>, vector<32x512xf32>
    %cst = arith.constant dense<0.000000e+00> : vector<16x512xf32>
    %2 = tpu.matmul %0, %1, %cst {dimension_numbers = #tpu.dot_dimension_numbers<[1], [0], [0], [1], [0, 0, 1, 1], [], []>} : vector<16x32xf32>, vector<32x512xf32>, vector<16x512xf32> -> vector<16x512xf32>
    %c0_3 = arith.constant 0 : index
    %c0_4 = arith.constant 0 : index
    %3 = vector.load %arg4[%c0_3, %c0_4] : memref<1x512xf32, #tpu.memory_space<vmem>>, vector<1x512xf32>
    %4 = vector.broadcast %3 : vector<1x512xf32> to vector<16x512xf32>
    %5 = arith.addf %2, %4 : vector<16x512xf32>
    %c0_5 = arith.constant 0 : index
    %c0_6 = arith.constant 0 : index
    %6 = vector.load %arg5[%c0_5, %c0_6] : memref<16x512xf32, #tpu.memory_space<vmem>>, vector<16x512xf32>
    tpu.vector_store %arg5[%c0_5, %c0_6], %5 {strides = array<i32>} : memref<16x512xf32, #tpu.memory_space<vmem>>, vector<16x512xf32>,
    return
  }
  func.func @transform_0(%arg0: i32, %arg1: i32) -> (i32, i32) {
    %c0_i32 = arith.constant 0 : i32
    %c0_i32_0 = arith.constant 0 : i32
    return %arg0, %c0_i32 : i32, i32
  }
  func.func @transform_1(%arg0: i32, %arg1: i32) -> (i32, i32) {
    %c0_i32 = arith.constant 0 : i32
    %c0_i32_0 = arith.constant 0 : i32
    return %c0_i32, %arg1 : i32, i32
  }
  func.func @transform_2(%arg0: i32, %arg1: i32) -> (i32, i32) {
    %c0_i32 = arith.constant 0 : i32
    %c0_i32_0 = arith.constant 0 : i32
    return %c0_i32, %arg1 : i32, i32
  }
  func.func @transform_3(%arg0: i32, %arg1: i32) -> (i32, i32) {
    %c0_i32 = arith.constant 0 : i32
    return %arg0, %arg1 : i32, i32
  }
}

</mosaic_0001>

<llo_original>
// kernel: biaffine_forward.3
$region0: #{biaffine_forward.3}
  #allocation0 [shape = 'u32[]', space=smem, size = 0x4, offset = 0x4, fixed_abs, tag = 'smem constant byte address 0x4 - core index']
  #allocation1 [shape = 'u32[144,128]{1,0:T(1,128)}', space=vmem, size = 0x12000, scoped, tag = 'internal scratch']
  %s0 = inlined_call_operand.vmem [shape: f32[2,8,128], index: 0, kind: input, shape index: {}]
  %s1 = inlined_call_operand.vmem [shape: f32[2,32,128], index: 1, kind: input, shape index: {}]
  %s2 = inlined_call_operand.vmem [shape: f32[2,8,32], index: 2, kind: output, shape index: {}]
  %s3 = sld [smem:[#allocation0]]
  $region41: #{biaffine_forward.3} parent=0
    _
  %s5 = ssub.s32 1, %s3
  %s6 = scalar_select 0, %s5, %s3
  loop: start=0, step=1, limit=4
  $region2: #{biaffine_forward.3} parent=0 // loop_pre_header
    _
  $region3: #{biaffine_forward.3} parent=0 // loop_header
    %s8 = sphi 0, %s12
    %p9 = scmp.ge.s32.totalorder %s8, 4
    %s15 = sphi 0, %s34
    %s16 = sphi 0, %s30
    %s17 = sphi 0, %s26
    %s18 = sphi 0, %s15
    %s19 = sphi 0, %s16
    %s20 = sphi 0, %s17
    %s21 = sphi 0, %s18
    %s22 = sphi 0, %s19
    %s23 = sphi 0, %s20
    %s39 = sphi 0, %s41
    %s42 = sphi 0, %s39
    %s43 = sphi 0, %s42
    %s59 = sphi 0, %s43
    %s67 = sphi 0, %s69
    %s70 = sphi 0, %s67
    %s71 = sphi 0, %s70
    %s87 = sphi 0, %s71
    %s97 = sphi 0, %s99
    %s100 = sphi 0, %s97
    %s101 = sphi 0, %s100
    %s117 = sphi 0, %s101
  $region4: #{biaffine_forward.3} parent=0 // loop_header_branch
    %11 = sbr.rel (%p9) target = $region8
  $region5: #{biaffine_forward.3} parent=0 // loop_body
    %s13 = ssub.s32 %s8, 1
    %s14 = ssub.s32 %s8, 2
    %s24 = sadd.s32 1, %s17
    %p25 = scmp.ge.s32.totalorder %s24, 1
    %s26 = scalar_select %p25, 0, %s24
    %s27 = sadd.s32 1, %s16
    %s28 = scalar_select %p25, %s27, %s16
    %p29 = scmp.ge.s32.totalorder %s28, 1
    %s30 = scalar_select %p29, 0, %s28
    %s31 = sadd.s32 1, %s15
    %s32 = scalar_select %p29, %s31, %s15
    %p33 = scmp.ge.s32.totalorder %s32, 2
    %s34 = scalar_select %p33, 0, %s32
    %s35 = ssub.s32 %s15, %s34
    %s36 = ssub.s32 %s16, %s30
    %s37 = sor.u32 %s35, %s36
    %p38 = scmp.eq.s32.totalorder %s37, 0
    %s40 = sadd.s32 %s39, 1
    %s41 = scalar_select %p38, %s39, %s40
    %p44 = pneg %p38
    %p45 = scmp.eq.s32.totalorder %s8, 1
    %p46 = por %p44, %p45
    %p47 = scmp.ne.s32.totalorder %s39, %s42
    %p48 = scmp.eq.s32.totalorder %s8, 0
    %p49 = por %p47, %p48
    %p50 = scmp.ne.s32.totalorder %s39, %s42
    %p51 = scmp.eq.s32.totalorder %s13, 1
    %p52 = por %p50, %p51
    %p53 = scmp.ne.s32.totalorder %s42, %s43
    %p54 = scmp.eq.s32.totalorder %s13, 0
    %p55 = por %p53, %p54
    %p56 = scmp.ne.s32.totalorder %s42, %s43
    %p57 = scmp.eq.s32.totalorder %s14, 1
    %p58 = por %p56, %p57
    %p60 = scmp.ne.s32.totalorder %s43, %s59
    %p61 = scmp.eq.s32.totalorder %s14, 0
    %p62 = por %p60, %p61
    %s63 = ssub.s32 %s15, %s34
    %s64 = ssub.s32 %s17, %s26
    %s65 = sor.u32 %s63, %s64
    %p66 = scmp.eq.s32.totalorder %s65, 0
    %s68 = sadd.s32 %s67, 1
    %s69 = scalar_select %p66, %s67, %s68
    %p72 = pneg %p66
    %p73 = scmp.eq.s32.totalorder %s8, 1
    %p74 = por %p72, %p73
    %p75 = scmp.ne.s32.totalorder %s67, %s70
    %p76 = scmp.eq.s32.totalorder %s8, 0
    %p77 = por %p75, %p76
    %p78 = scmp.ne.s32.totalorder %s67, %s70
    %p79 = scmp.eq.s32.totalorder %s13, 1
    %p80 = por %p78, %p79
    %p81 = scmp.ne.s32.totalorder %s70, %s71
    %p82 = scmp.eq.s32.totalorder %s13, 0
    %p83 = por %p81, %p82
    %p84 = scmp.ne.s32.totalorder %s70, %s71
    %p85 = scmp.eq.s32.totalorder %s14, 1
    %p86 = por %p84, %p85
    %p88 = scmp.ne.s32.totalorder %s71, %s87
    %p89 = scmp.eq.s32.totalorder %s14, 0
    %p90 = por %p88, %p89
    %s91 = ssub.s32 %s15, %s34
    %s92 = ssub.s32 %s16, %s30
    %s93 = sor.u32 %s91, %s92
    %s94 = ssub.s32 %s17, %s26
    %s95 = sor.u32 %s93, %s94
    %p96 = scmp.eq.s32.totalorder %s95, 0
    %s98 = sadd.s32 %s97, 1
    %s99 = scalar_select %p96, %s97, %s98
    %p102 = pneg %p96
    %p103 = scmp.eq.s32.totalorder %s8, 1
    %p104 = por %p102, %p103
    %p105 = scmp.ne.s32.totalorder %s97, %s100
    %p106 = scmp.eq.s32.totalorder %s8, 0
    %p107 = por %p105, %p106
    %p108 = scmp.ne.s32.totalorder %s97, %s100
    %p109 = scmp.eq.s32.totalorder %s13, 1
    %p110 = por %p108, %p109
    %p111 = scmp.ne.s32.totalorder %s100, %s101
    %p112 = scmp.eq.s32.totalorder %s13, 0
    %p113 = por %p111, %p112
    %p114 = scmp.ne.s32.totalorder %s100, %s101
    %p115 = scmp.eq.s32.totalorder %s14, 1
    %p116 = por %p114, %p115
    %p118 = scmp.ne.s32.totalorder %s101, %s117
    %p119 = scmp.eq.s32.totalorder %s14, 0
    %p120 = por %p118, %p119
    %p121 = scmp.le.s32.totalorder 1, %s8
    %p122 = scmp.lt.s32.totalorder %s8, 3
    %p123 = pnand %p121, %p122
    %p124 = pneg %p123
    // Predicated region
    $region9: #{biaffine_forward.3} parent=5 // pred_check
      _
    $region10: #{biaffine_forward.3} parent=5 // pred_check_branch
      %126 = sbr.rel (%p123) target = $region12
    $region11: #{biaffine_forward.3} parent=5 // pred_region
      %s127 = ssub.s32 %s8, 1
    $region12: #{biaffine_forward.3} parent=5 // pred_fallthru
      _
    %p128 = scmp.lt.s32.totalorder %s8, 2
    // Predicated region
    $region13: #{biaffine_forward.3} parent=5 // pred_check
      %p129 = pneg %p128
    $region14: #{biaffine_forward.3} parent=5 // pred_check_branch
      %131 = sbr.rel (%p129) target = $region16
    $region15: #{biaffine_forward.3} parent=5 // pred_region
      // Predicated region
      $region17: #{biaffine_forward.3} parent=15 // pred_check
        %p132 = pneg %p49
      $region18: #{biaffine_forward.3} parent=15 // pred_check_branch
        %134 = sbr.rel (%p132) target = $region20
      $region19: #{biaffine_forward.3} parent=15 // pred_region
        %p135 = scmp.lt.s32.totalorder %s15, 1
        %s136 = scalar_select %p135, %s15, 1
        %p137 = scmp.lt.s32.totalorder %s16, 0
        %s138 = scalar_select %p137, %s16, 0
        %s139 = sadd.s32 %s138, %s136
        %s140 = smul.addr %s139, 8
        %s141 = scalar_lea.vmem %s0, %s140
      $region20: #{biaffine_forward.3} parent=15 // pred_fallthru
        _
      // Predicated region
      $region21: #{biaffine_forward.3} parent=15 // pred_check
        %p142 = pneg %p77
      $region22: #{biaffine_forward.3} parent=15 // pred_check_branch
        %144 = sbr.rel (%p142) target = $region24
      $region23: #{biaffine_forward.3} parent=15 // pred_region
        %s145 = smul.u32 4, %s17
        %p146 = scmp.lt.s32.totalorder %s15, 1
        %s147 = scalar_select %p146, %s15, 1
        %p148 = scmp.lt.s32.totalorder %s145, 3
        %s149 = scalar_select %p148, %s145, 3
        %s150 = smul.addr %s147, 4
        %s151 = sadd.s32 %s149, %s150
        %s152 = smul.addr %s151, 8
        %s153 = scalar_lea.vmem %s1, %s152
        %s154 = smul.u32 4, %s17
      $region24: #{biaffine_forward.3} parent=15 // pred_fallthru
        _
    $region16: #{biaffine_forward.3} parent=5 // pred_fallthru
      _
    %p155 = scmp.le.s32.totalorder 1, %s8
    %p156 = scmp.lt.s32.totalorder %s8, 3
    %p157 = pnand %p155, %p156
    %p158 = pneg %p157
    // Predicated region
    $region25: #{biaffine_forward.3} parent=5 // pred_check
      _
    $region26: #{biaffine_forward.3} parent=5 // pred_check_branch
      %160 = sbr.rel (%p157) target = $region28
    $region27: #{biaffine_forward.3} parent=5 // pred_region
      %s161 = ssub.s32 %s8, 1
      %p162 = scmp.lt.s32.totalorder %s18, 1
      %s163 = scalar_select %p162, %s18, 1
      %p164 = scmp.lt.s32.totalorder %s19, 0
      %s165 = scalar_select %p164, %s19, 0
      %s166 = sadd.s32 %s165, %s163
      %s167 = smul.addr %s166, 8
      %s168 = scalar_lea.vmem %s0, %s167
      %p169 = pneg %p55
      %p170 = pneg %p52
      %s171 = smul.u32 4, %s20
      %p172 = scmp.lt.s32.totalorder %s18, 1
      %s173 = scalar_select %p172, %s18, 1
      %p174 = scmp.lt.s32.totalorder %s171, 3
      %s175 = scalar_select %p174, %s171, 3
      %s176 = smul.addr %s173, 4
      %s177 = sadd.s32 %s175, %s176
      %s178 = smul.addr %s177, 8
      %s179 = scalar_lea.vmem %s1, %s178
      %p180 = pneg %p83
      %p181 = pneg %p80
      %p182 = pneg %p113
      %p183 = pneg %p110
      %p184 = scmp.lt.s32.totalorder %s18, 1
      %s185 = scalar_select %p184, %s18, 1
      %p186 = scmp.lt.s32.totalorder %s19, 0
      %s187 = scalar_select %p186, %s19, 0
      %p188 = scmp.lt.s32.totalorder %s20, 0
      %s189 = scalar_select %p188, %s20, 0
      %s190 = sadd.s32 %s189, %s187
      %s191 = sadd.s32 %s190, %s185
      %s192 = smul.addr %s191, 8
      %s193 = scalar_lea.vmem %s2, %s192
      %p194 = scmp.lt.s32.totalorder %s18, 1
      %s195 = scalar_select %p194, %s18, 1
      %p196 = scmp.lt.s32.totalorder %s19, 0
      %s197 = scalar_select %p196, %s19, 0
      %s198 = sadd.s32 %s197, %s195
      %s199 = smul.addr %s198, 8
      %s200 = scalar_lea.vmem %s0, %s199
      %s201 = smul.u32 4, %s20
      %p202 = scmp.lt.s32.totalorder %s18, 1
      %s203 = scalar_select %p202, %s18, 1
      %p204 = scmp.lt.s32.totalorder %s201, 3
      %s205 = scalar_select %p204, %s201, 3
      %s206 = smul.addr %s203, 4
      %s207 = sadd.s32 %s205, %s206
      %s208 = smul.addr %s207, 8
      %s209 = scalar_lea.vmem %s1, %s208
      %s210 = smul.u32 4, %s20
      %p211 = scmp.lt.s32.totalorder %s18, 1
      %s212 = scalar_select %p211, %s18, 1
      %p213 = scmp.lt.s32.totalorder %s19, 0
      %s214 = scalar_select %p213, %s19, 0
      %p215 = scmp.lt.s32.totalorder %s20, 0
      %s216 = scalar_select %p215, %s20, 0
      %s217 = sadd.s32 %s216, %s214
      %s218 = sadd.s32 %s217, %s212
      %s219 = smul.addr %s218, 8
      %s220 = scalar_lea.vmem %s2, %s219
      %v221 = vld [vmem:[%s200] sm:$0xff]
      %v222 = vld [vmem:[%s209] sm:$0xff]
      %v223 = vld [vmem:[%s209 + $0x8] sm:$0xff]
      %v224 = vld [vmem:[%s209 + $0x10] sm:$0xff]
      %v225 = vld [vmem:[%s209 + $0x18] sm:$0xff]
      %226 = vmatprep.subr.mxu0 0.0
      %227 = vmatpush1.xpose.msra.mxu0 %v222
      %228 = vmatprep.subr.mxu0 0.0
      %229 = vmatpush1.xpose.msra.mxu0 %v223
      %230 = vmatprep.subr.mxu0 0.0
      %231 = vmatpush1.xpose.msra.mxu0 %v224
      %232 = vmatprep.subr.mxu0 0.0
      %233 = vmatpush1.xpose.msra.mxu0 %v225
      %234 = vmatprep.subr.mxu0 0.0
      %235 = vmatpush1.xpose.msra.mxu0 0.0
      %236 = vmatprep.subr.mxu0 0.0
      %237 = vmatpush1.xpose.msra.mxu0 0.0
      %238 = vmatprep.subr.mxu0 0.0
      %239 = vmatpush1.xpose.msra.mxu0 0.0
      %240 = vmatprep.subr.mxu0 0.0
      %241 = vmatpush1.xpose.msra.mxu0 0.0
      %242 = vmatprep.subr.mxu0 0.0
      %243 = vmatpush1.xpose.msra.mxu0 0.0
      %244 = vmatprep.subr.mxu0 0.0
      %245 = vmatpush1.xpose.msra.mxu0 0.0
      %246 = vmatprep.subr.mxu0 0.0
      %247 = vmatpush1.xpose.msra.mxu0 0.0
      %248 = vmatprep.subr.mxu0 0.0
      %249 = vmatpush1.xpose.msra.mxu0 0.0
      %250 = vmatprep.subr.mxu0 0.0
      %251 = vmatpush1.xpose.msra.mxu0 0.0
      %252 = vmatprep.subr.mxu0 0.0
      %253 = vmatpush1.xpose.msra.mxu0 0.0
      %254 = vmatprep.subr.mxu0 0.0
      %255 = vmatpush1.xpose.msra.mxu0 0.0
      %256 = vmatprep.subr.mxu0 0.0
      %257 = vmatpush1.xpose.msra.mxu0 0.0
      %258 = vmatprep.subr.mxu0 0.0
      %259 = vmatpush1.xpose.msra.mxu0 0.0
      %260 = vmatprep.subr.mxu0 0.0
      %261 = vmatpush1.xpose.msra.mxu0 0.0
      %262 = vmatprep.subr.mxu0 0.0
      %263 = vmatpush1.xpose.msra.mxu0 0.0
      %264 = vmatprep.subr.mxu0 0.0
      %265 = vmatpush1.xpose.msra.mxu0 0.0
      %266 = vmatprep.subr.mxu0 0.0
      %267 = vmatpush1.xpose.msra.mxu0 0.0
      %268 = vmatprep.subr.mxu0 0.0
      %269 = vmatpush1.xpose.msra.mxu0 0.0
      %270 = vmatprep.subr.mxu0 0.0
      %271 = vmatpush1.xpose.msra.mxu0 0.0
      %272 = vmatprep.subr.mxu0 0.0
      %273 = vmatpush1.xpose.msra.mxu0 0.0
      %274 = vmatprep.subr.mxu0 0.0
      %275 = vmatpush1.xpose.msra.mxu0 0.0
      %276 = vmatprep.subr.mxu0 0.0
      %277 = vmatpush1.xpose.msra.mxu0 0.0
      %278 = vmatprep.subr.mxu0 0.0
      %279 = vmatpush1.xpose.msra.mxu0 0.0
      %280 = vmatprep.subr.mxu0 0.0
      %281 = vmatpush1.xpose.msra.mxu0 0.0
      %282 = vmatprep.subr.mxu0 0.0
      %283 = vmatpush1.xpose.msra.mxu0 0.0
      %284 = vmatprep.subr.mxu0 0.0
      %285 = vmatpush1.xpose.msra.mxu0 0.0
      %286 = vmatprep.subr.mxu0 0.0
      %287 = vmatpush1.xpose.msra.mxu0 0.0
      %288 = vmatprep.subr.mxu0 0.0
      %289 = vmatpush1.xpose.msra.mxu0 0.0
      %290 = vmatprep.mubr.f32.mxu0 0.0
      %291 = vmatmul.mubr.f32.gmra.mrb[0].mxu0 %v221
      %v292 = vpop.f32.mrb[0].mxu0
      %v293 = vadd.f32 0.0, %v292
      %v294 = vpop.f32.mrb[0].mxu0
      %295 = vdwg.mxu0
      %vm296 = vcmask 261120
      %297 = vst.msk [vmem:[%s220] sm:$0xff] %vm296, %v293
      %p298 = scmp.lt.s32.totalorder %s18, 1
      %s299 = scalar_select %p298, %s18, 1
      %p300 = scmp.lt.s32.totalorder %s19, 0
      %s301 = scalar_select %p300, %s19, 0
      %p302 = scmp.lt.s32.totalorder %s20, 0
      %s303 = scalar_select %p302, %s20, 0
      %s304 = sadd.s32 %s303, %s301
      %s305 = sadd.s32 %s304, %s299
      %s306 = smul.addr %s305, 8
      %s307 = scalar_lea.vmem %s2, %s306
      // Predicated region
      $region29: #{biaffine_forward.3} parent=27 // pred_check
        %p308 = pneg %p110
      $region30: #{biaffine_forward.3} parent=27 // pred_check_branch
        %310 = sbr.rel (%p308) target = $region32
      $region31: #{biaffine_forward.3} parent=27 // pred_region
        _
      $region32: #{biaffine_forward.3} parent=27 // pred_fallthru
        _
    $region28: #{biaffine_forward.3} parent=5 // pred_fallthru
      _
    %p311 = scmp.le.s32.totalorder 2, %s8
    // Predicated region
    $region33: #{biaffine_forward.3} parent=5 // pred_check
      %p312 = pneg %p311
    $region34: #{biaffine_forward.3} parent=5 // pred_check_branch
      %314 = sbr.rel (%p312) target = $region36
    $region35: #{biaffine_forward.3} parent=5 // pred_region
      %s315 = ssub.s32 %s8, 2
      // Predicated region
      $region37: #{biaffine_forward.3} parent=35 // pred_check
        %p316 = pneg %p116
      $region38: #{biaffine_forward.3} parent=35 // pred_check_branch
        %318 = sbr.rel (%p316) target = $region40
      $region39: #{biaffine_forward.3} parent=35 // pred_region
        %p319 = scmp.lt.s32.totalorder %s21, 1
        %s320 = scalar_select %p319, %s21, 1
        %p321 = scmp.lt.s32.totalorder %s22, 0
        %s322 = scalar_select %p321, %s22, 0
        %p323 = scmp.lt.s32.totalorder %s23, 0
        %s324 = scalar_select %p323, %s23, 0
        %s325 = sadd.s32 %s324, %s322
        %s326 = sadd.s32 %s325, %s320
        %s327 = smul.addr %s326, 8
        %s328 = scalar_lea.vmem %s2, %s327
      $region40: #{biaffine_forward.3} parent=35 // pred_fallthru
        _
    $region36: #{biaffine_forward.3} parent=5 // pred_fallthru
      _
  $region6: #{biaffine_forward.3} parent=0 // loop_footer
    %s12 = sadd.s32 1, %s8
  $region7: #{biaffine_forward.3} parent=0 // loop_footer_branch
    %7 = sbr.rel target = $region3
  $region8: #{biaffine_forward.3} parent=0 // loop_exit
    _

// kernel: biaffine_forward.2
$region0: #{biaffine_forward.2}
  #allocation0 [shape = 'u32[]', space=smem, size = 0x4, offset = 0x4, fixed_abs, tag = 'smem constant byte address 0x4 - core index']
  #allocation1 [shape = 'u32[144,128]{1,0:T(1,128)}', space=vmem, size = 0x12000, scoped, tag = 'internal scratch']
  %s0 = inlined_call_operand.vmem [shape: f32[16,32], index: 0, kind: input, shape index: {}]
  %s1 = inlined_call_operand.vmem [shape: f32[32,512], index: 1, kind: input, shape index: {}]
  %s2 = inlined_call_operand.vmem [shape: f32[1,512], index: 2, kind: input, shape index: {}]
  %s3 = inlined_call_operand.vmem [shape: f32[16,512], index: 3, kind: output, shape index: {}]
  %s4 = sld [smem:[#allocation0]]
  $region22: #{biaffine_forward.2} parent=0
    _
  %s6 = ssub.s32 1, %s4
  %s7 = scalar_select 0, %s6, %s4
  // Predicated region
  $region2: #{biaffine_forward.2} parent=0 // pred_check
    _
  $region3: #{biaffine_forward.2} parent=0 // pred_check_branch
    %9 = sbr.rel (0) target = $region5
  $region4: #{biaffine_forward.2} parent=0 // pred_region
    _
  $region5: #{biaffine_forward.2} parent=0 // pred_fallthru
    _
  // Predicated region
  $region6: #{biaffine_forward.2} parent=0 // pred_check
    _
  $region7: #{biaffine_forward.2} parent=0 // pred_check_branch
    %11 = sbr.rel (0) target = $region9
  $region8: #{biaffine_forward.2} parent=0 // pred_region
    _
  $region9: #{biaffine_forward.2} parent=0 // pred_fallthru
    _
  // Predicated region
  $region10: #{biaffine_forward.2} parent=0 // pred_check
    _
  $region11: #{biaffine_forward.2} parent=0 // pred_check_branch
    %13 = sbr.rel (0) target = $region13
  $region12: #{biaffine_forward.2} parent=0 // pred_region
    _
  $region13: #{biaffine_forward.2} parent=0 // pred_fallthru
    _
  %v14 = vld [vmem:[%s0] sm:$0xff]
  %v15 = vld [vmem:[%s0 + $0x8] sm:$0xff]
  %v16 = vld [vmem:[%s1] sm:$0xff]
  %v17 = vld [vmem:[%s1 + $0x8] sm:$0xff]
  %v18 = vld [vmem:[%s1 + $0x10] sm:$0xff]
  %v19 = vld [vmem:[%s1 + $0x18] sm:$0xff]
  %v20 = vld [vmem:[%s1 + $0x20] sm:$0xff]
  %v21 = vld [vmem:[%s1 + $0x28] sm:$0xff]
  %v22 = vld [vmem:[%s1 + $0x30] sm:$0xff]
  %v23 = vld [vmem:[%s1 + $0x38] sm:$0xff]
  %v24 = vld [vmem:[%s1 + $0x40] sm:$0xff]
  %v25 = vld [vmem:[%s1 + $0x48] sm:$0xff]
  %v26 = vld [vmem:[%s1 + $0x50] sm:$0xff]
  %v27 = vld [vmem:[%s1 + $0x58] sm:$0xff]
  %v28 = vld [vmem:[%s1 + $0x60] sm:$0xff]
  %v29 = vld [vmem:[%s1 + $0x68] sm:$0xff]
  %v30 = vld [vmem:[%s1 + $0x70] sm:$0xff]
  %v31 = vld [vmem:[%s1 + $0x78] sm:$0xff]
  %v32 = vld [vmem:[%s2] sm:$0xf]
  %v34 = vlaneseq
  %v35 = vshrl.u32 %v34, 7
  %v36 = vsub.s32 0, %v35
  %v37 = vrot.slane %v32, %v36
  %v38 = vlaneseq
  %v39 = vshrl.u32 %v38, 7
  %v40 = vsub.s32 1, %v39
  %v41 = vrot.slane %v32, %v40
  %v42 = vlaneseq
  %v43 = vshrl.u32 %v42, 7
  %v44 = vsub.s32 2, %v43
  %v45 = vrot.slane %v32, %v44
  %v46 = vlaneseq
  %v47 = vshrl.u32 %v46, 7
  %v48 = vsub.s32 3, %v47
  %v49 = vrot.slane %v32, %v48
  %vm54 = vcmask 261120
  %v56 = vsel %vm54, %v14, 0
  %v59 = vsel %vm54, %v15, 0
  %61 = vmatprep.subr.mxu0 %v17
  %62 = vmatpush1.msra.mxu0 %v16
  %63 = vmatprep.subr.mxu0 %v21
  %64 = vmatpush1.msra.mxu0 %v20
  %65 = vmatprep.subr.mxu0 %v25
  %66 = vmatpush1.msra.mxu0 %v24
  %67 = vmatprep.subr.mxu0 %v29
  %68 = vmatpush1.msra.mxu0 %v28
  %69 = vmatprep.subr.mxu0 0.0
  %70 = vmatpush1.msra.mxu0 0.0
  %71 = vmatprep.subr.mxu0 0.0
  %72 = vmatpush1.msra.mxu0 0.0
  %73 = vmatprep.subr.mxu0 0.0
  %74 = vmatpush1.msra.mxu0 0.0
  %75 = vmatprep.subr.mxu0 0.0
  %76 = vmatpush1.msra.mxu0 0.0
  %77 = vmatprep.subr.mxu0 0.0
  %78 = vmatpush1.msra.mxu0 0.0
  %79 = vmatprep.subr.mxu0 0.0
  %80 = vmatpush1.msra.mxu0 0.0
  %81 = vmatprep.subr.mxu0 0.0
  %82 = vmatpush1.msra.mxu0 0.0
  %83 = vmatprep.subr.mxu0 0.0
  %84 = vmatpush1.msra.mxu0 0.0
  %85 = vmatprep.subr.mxu0 0.0
  %86 = vmatpush1.msra.mxu0 0.0
  %87 = vmatprep.subr.mxu0 0.0
  %88 = vmatpush1.msra.mxu0 0.0
  %89 = vmatprep.subr.mxu0 0.0
  %90 = vmatpush1.msra.mxu0 0.0
  %91 = vmatprep.subr.mxu0 0.0
  %92 = vmatpush1.msra.mxu0 0.0
  %93 = vmatprep.subr.mxu0 0.0
  %94 = vmatpush1.msra.mxu0 0.0
  %95 = vmatprep.subr.mxu0 0.0
  %96 = vmatpush1.msra.mxu0 0.0
  %97 = vmatprep.subr.mxu0 0.0
  %98 = vmatpush1.msra.mxu0 0.0
  %99 = vmatprep.subr.mxu0 0.0
  %100 = vmatpush1.msra.mxu0 0.0
  %101 = vmatprep.subr.mxu0 0.0
  %102 = vmatpush1.msra.mxu0 0.0
  %103 = vmatprep.subr.mxu0 0.0
  %104 = vmatpush1.msra.mxu0 0.0
  %105 = vmatprep.subr.mxu0 0.0
  %106 = vmatpush1.msra.mxu0 0.0
  %107 = vmatprep.subr.mxu0 0.0
  %108 = vmatpush1.msra.mxu0 0.0
  %109 = vmatprep.subr.mxu0 0.0
  %110 = vmatpush1.msra.mxu0 0.0
  %111 = vmatprep.subr.mxu0 0.0
  %112 = vmatpush1.msra.mxu0 0.0
  %113 = vmatprep.subr.mxu0 0.0
  %114 = vmatpush1.msra.mxu0 0.0
  %115 = vmatprep.subr.mxu0 0.0
  %116 = vmatpush1.msra.mxu0 0.0
  %117 = vmatprep.subr.mxu0 0.0
  %118 = vmatpush1.msra.mxu0 0.0
  %119 = vmatprep.subr.mxu0 0.0
  %120 = vmatpush1.msra.mxu0 0.0
  %121 = vmatprep.subr.mxu0 0.0
  %122 = vmatpush1.msra.mxu0 0.0
  %123 = vmatprep.subr.mxu0 0.0
  %124 = vmatpush1.msra.mxu0 0.0
  %125 = vmatprep.mubr.f32.mxu0 0.0
  %126 = vmatmul.mubr.f32.gmra.mrb[0].mxu0 %v56
  %v127 = vpop.f32.mrb[0].mxu0
  %v128 = vadd.f32 %v37, %v127
  %v129 = vpop.f32.mrb[0].mxu0
  %v130 = vadd.f32 %v41, %v129
  %131 = vmatprep.mubr.f32.mxu0 0.0
  %132 = vmatmul.mubr.f32.gmra.mrb[0].mxu0 %v59
  %v133 = vpop.f32.mrb[0].mxu0
  %v134 = vadd.f32 %v37, %v133
  %v135 = vpop.f32.mrb[0].mxu0
  %v136 = vadd.f32 %v41, %v135
  %137 = vdwg.mxu0
  %138 = vmatprep.subr.mxu0 %v19
  %139 = vmatpush1.msra.mxu0 %v18
  %140 = vmatprep.subr.mxu0 %v23
  %141 = vmatpush1.msra.mxu0 %v22
  %142 = vmatprep.subr.mxu0 %v27
  %143 = vmatpush1.msra.mxu0 %v26
  %144 = vmatprep.subr.mxu0 %v31
  %145 = vmatpush1.msra.mxu0 %v30
  %146 = vmatprep.subr.mxu0 0.0
  %147 = vmatpush1.msra.mxu0 0.0
  %148 = vmatprep.subr.mxu0 0.0
  %149 = vmatpush1.msra.mxu0 0.0
  %150 = vmatprep.subr.mxu0 0.0
  %151 = vmatpush1.msra.mxu0 0.0
  %152 = vmatprep.subr.mxu0 0.0
  %153 = vmatpush1.msra.mxu0 0.0
  %154 = vmatprep.subr.mxu0 0.0
  %155 = vmatpush1.msra.mxu0 0.0
  %156 = vmatprep.subr.mxu0 0.0
  %157 = vmatpush1.msra.mxu0 0.0
  %158 = vmatprep.subr.mxu0 0.0
  %159 = vmatpush1.msra.mxu0 0.0
  %160 = vmatprep.subr.mxu0 0.0
  %161 = vmatpush1.msra.mxu0 0.0
  %162 = vmatprep.subr.mxu0 0.0
  %163 = vmatpush1.msra.mxu0 0.0
  %164 = vmatprep.subr.mxu0 0.0
  %165 = vmatpush1.msra.mxu0 0.0
  %166 = vmatprep.subr.mxu0 0.0
  %167 = vmatpush1.msra.mxu0 0.0
  %168 = vmatprep.subr.mxu0 0.0
  %169 = vmatpush1.msra.mxu0 0.0
  %170 = vmatprep.subr.mxu0 0.0
  %171 = vmatpush1.msra.mxu0 0.0
  %172 = vmatprep.subr.mxu0 0.0
  %173 = vmatpush1.msra.mxu0 0.0
  %174 = vmatprep.subr.mxu0 0.0
  %175 = vmatpush1.msra.mxu0 0.0
  %176 = vmatprep.subr.mxu0 0.0
  %177 = vmatpush1.msra.mxu0 0.0
  %178 = vmatprep.subr.mxu0 0.0
  %179 = vmatpush1.msra.mxu0 0.0
  %180 = vmatprep.subr.mxu0 0.0
  %181 = vmatpush1.msra.mxu0 0.0
  %182 = vmatprep.subr.mxu0 0.0
  %183 = vmatpush1.msra.mxu0 0.0
  %184 = vmatprep.subr.mxu0 0.0
  %185 = vmatpush1.msra.mxu0 0.0
  %186 = vmatprep.subr.mxu0 0.0
  %187 = vmatpush1.msra.mxu0 0.0
  %188 = vmatprep.subr.mxu0 0.0
  %189 = vmatpush1.msra.mxu0 0.0
  %190 = vmatprep.subr.mxu0 0.0
  %191 = vmatpush1.msra.mxu0 0.0
  %192 = vmatprep.subr.mxu0 0.0
  %193 = vmatpush1.msra.mxu0 0.0
  %194 = vmatprep.subr.mxu0 0.0
  %195 = vmatpush1.msra.mxu0 0.0
  %196 = vmatprep.subr.mxu0 0.0
  %197 = vmatpush1.msra.mxu0 0.0
  %198 = vmatprep.subr.mxu0 0.0
  %199 = vmatpush1.msra.mxu0 0.0
  %200 = vmatprep.subr.mxu0 0.0
  %201 = vmatpush1.msra.mxu0 0.0
  %202 = vmatprep.mubr.f32.mxu0 0.0
  %203 = vmatmul.mubr.f32.gmra.mrb[0].mxu0 %v56
  %v204 = vpop.f32.mrb[0].mxu0
  %v205 = vadd.f32 %v45, %v204
  %v206 = vpop.f32.mrb[0].mxu0
  %v207 = vadd.f32 %v49, %v206
  %208 = vmatprep.mubr.f32.mxu0 0.0
  %209 = vmatmul.mubr.f32.gmra.mrb[0].mxu0 %v59
  %v210 = vpop.f32.mrb[0].mxu0
  %v211 = vadd.f32 %v45, %v210
  %v212 = vpop.f32.mrb[0].mxu0
  %v213 = vadd.f32 %v49, %v212
  %214 = vdwg.mxu0
  %215 = vst [vmem:[%s3] sm:$0xff] %v128
  %216 = vst [vmem:[%s3 + $0x8] sm:$0xff] %v130
  %217 = vst [vmem:[%s3 + $0x10] sm:$0xff] %v205
  %218 = vst [vmem:[%s3 + $0x18] sm:$0xff] %v207
  %219 = vst [vmem:[%s3 + $0x20] sm:$0xff] %v134
  %220 = vst [vmem:[%s3 + $0x28] sm:$0xff] %v136
  %221 = vst [vmem:[%s3 + $0x30] sm:$0xff] %v211
  %222 = vst [vmem:[%s3 + $0x38] sm:$0xff] %v213
  // Predicated region
  $region14: #{biaffine_forward.2} parent=0 // pred_check
    _
  $region15: #{biaffine_forward.2} parent=0 // pred_check_branch
    %224 = sbr.rel (0) target = $region17
  $region16: #{biaffine_forward.2} parent=0 // pred_region
    _
  $region17: #{biaffine_forward.2} parent=0 // pred_fallthru
    _
  // Predicated region
  $region18: #{biaffine_forward.2} parent=0 // pred_check
    _
  $region19: #{biaffine_forward.2} parent=0 // pred_check_branch
    %226 = sbr.rel (0) target = $region21
  $region20: #{biaffine_forward.2} parent=0 // pred_region
    _
  $region21: #{biaffine_forward.2} parent=0 // pred_fallthru
    _

</llo_original>
